<compile_context>
chip_gen: v5e
topology: v5e:2x2
jax: 0.10.0
libtpu: 0.0.40
codegen_flags: <defaults>
</compile_context>

<pallas_src>
import functools
import math

import jax
import jax.numpy as jnp
from jax import lax
from jax.experimental import pallas as pl
from jax.experimental.pallas import tpu as pltpu


# ------------------------------ Pallas kernel ------------------------------ #

def _dha_kernel(x_ref, w_ref, b_ref, o_ref, *, input_dim, attention_dim, l1):
    D, A, L1 = input_dim, attention_dim, l1

    x = x_ref[...]                       # (L1+L2, D)   both inputs, row-packed
    w = w_ref[...]                       # (max(D,A), 3A + D)  [Wq | Wk | Wv | Wo]
    b = b_ref[...]                       # (1, 3A + D)         [bq | bk | bv | bo]

    w_qkv = w[:D, :3 * A]                # (D, 3A)
    w_o = w[:A, 3 * A:]                  # (A, D)
    b_qkv = b[:, :3 * A]                 # (1, 3A)
    b_o = b[:, 3 * A:]                   # (1, D)

    # One MXU pass for BOTH inputs' Q/K/V projections.
    p = jnp.dot(x, w_qkv, preferred_element_type=jnp.float32) + b_qkv  # (L1+L2, 3A)
    q1, k1, v1 = p[:L1, :A], p[:L1, A:2 * A], p[:L1, 2 * A:]
    q2, k2, v2 = p[L1:, :A], p[L1:, A:2 * A], p[L1:, 2 * A:]

    def cross_attend(q, k, v):
        # Contract last dims of Q and K directly -> no transposed K copy.
        # NB: reference module applies no 1/sqrt(d) scale.
        s = lax.dot_general(q, k, dimension_numbers=(((1,), (1,)), ((), ())),
                            preferred_element_type=jnp.float32)
        m = jnp.max(s, axis=-1, keepdims=True)
        e = jnp.exp(s - m)
        attn = e * pl.reciprocal(jnp.sum(e, axis=-1, keepdims=True), approx=True)
        return jnp.dot(attn, v, preferred_element_type=jnp.float32)   # (Lq, A)

    a1 = cross_attend(q1, k2, v2)        # attended_input1 = softmax(q1 k2^T) v2
    a2 = cross_attend(q2, k1, v1)        # attended_input2 = softmax(q2 k1^T) v1
    a = jnp.concatenate([a1, a2], axis=0)                              # (L1+L2, A)

    # One MXU pass for BOTH output projections.
    o_ref[...] = jnp.dot(a, w_o, preferred_element_type=jnp.float32) + b_o


# --------------------------------- wrapper ---------------------------------- #

@jax.jit
def double_headed_attention(x1, x2, wq, bq, wk, bk, wv, bv, wo, bo):
    """Fused forward of DoubleHeadedAttention.

    x1: (L1, D), x2: (L2, D)
    wq/wk/wv: (D, A), bq/bk/bv: (A,), wo: (A, D), bo: (D,)
    returns (out1: (L1, D), out2: (L2, D))
    """
    L1, D = x1.shape
    L2 = x2.shape[0]
    A = wq.shape[1]
    rows = max(D, A)

    # Row-pack the two inputs; lane-pack all parameters into single slabs
    # (3A + D = 128 lanes at D=A=32 -> exactly vreg/tile aligned).
    x = jnp.concatenate([x1, x2], axis=0)                       # (L1+L2, D)
    w_qkv = jnp.concatenate([wq, wk, wv], axis=1)               # (D, 3A)
    w_packed = jnp.concatenate(
        [jnp.pad(w_qkv, ((0, rows - D), (0, 0))),
         jnp.pad(wo, ((0, rows - A), (0, 0)))], axis=1)          # (rows, 3A + D)
    b_packed = jnp.concatenate([bq, bk, bv, bo]).reshape(1, 3 * A + D)

    flops = (2 * (L1 + L2) * D * 3 * A        # packed QKV projection
             + 4 * L1 * L2 * A                # two score matmuls
             + 4 * L1 * L2 * A                # two attn @ V matmuls
             + 2 * (L1 + L2) * A * D)         # packed output projection
    bytes_accessed = 4 * (x.size + w_packed.size + b_packed.size + (L1 + L2) * D)
    cost = pl.CostEstimate(flops=flops, transcendentals=2 * L1 * L2,
                           bytes_accessed=bytes_accessed)

    out = pl.pallas_call(
        functools.partial(_dha_kernel, input_dim=D, attention_dim=A, l1=L1),
        out_shape=jax.ShapeDtypeStruct((L1 + L2, D), jnp.float32),
        cost_estimate=cost,
    )(x, w_packed, b_packed)

    return out[:L1], out[L1:]


# --------------------------- pure-JAX reference ----------------------------- #

def reference_forward(x1, x2, wq, bq, wk, bk, wv, bv, wo, bo):
    q1, q2 = x1 @ wq + bq, x2 @ wq + bq
    k1, k2 = x1 @ wk + bk, x2 @ wk + bk
    v1, v2 = x1 @ wv + bv, x2 @ wv + bv
    a1 = jax.nn.softmax(q1 @ k2.T, axis=-1)
    a2 = jax.nn.softmax(q2 @ k1.T, axis=-1)
    o1 = (a1 @ v2) @ wo + bo
    o2 = (a2 @ v1) @ wo + bo
    return o1, o2


# ---------------------------------- main ------------------------------------ #

if __name__ == "__main__":
    input_dim = 32        # D
    attention_dim = 32    # A
    L1, L2 = 16, 8        # two (possibly different-length) input sequences

    key = jax.random.PRNGKey(0)
    kx1, kx2, kq, kk, kv, ko, kbq, kbk, kbv, kbo = jax.random.split(key, 10)

    x1 = jax.random.normal(kx1, (L1, input_dim), jnp.float32)
    x2 = jax.random.normal(kx2, (L2, input_dim), jnp.float32)

    ws = 1.0 / math.sqrt(input_dim)
    wq = jax.random.normal(kq, (input_dim, attention_dim), jnp.float32) * ws
    wk = jax.random.normal(kk, (input_dim, attention_dim), jnp.float32) * ws
    wv = jax.random.normal(kv, (input_dim, attention_dim), jnp.float32) * ws
    wo = jax.random.normal(ko, (attention_dim, input_dim), jnp.float32) * ws
    bq = jax.random.normal(kbq, (attention_dim,), jnp.float32) * 0.02
    bk = jax.random.normal(kbk, (attention_dim,), jnp.float32) * 0.02
    bv = jax.random.normal(kbv, (attention_dim,), jnp.float32) * 0.02
    bo = jax.random.normal(kbo, (input_dim,), jnp.float32) * 0.02

    out1, out2 = double_headed_attention(x1, x2, wq, bq, wk, bk, wv, bv, wo, bo)
    jax.block_until_ready((out1, out2))

    assert out1.shape == (L1, input_dim) and out2.shape == (L2, input_dim)

    ref1, ref2 = reference_forward(x1, x2, wq, bq, wk, bk, wv, bv, wo, bo)
    assert jnp.allclose(out1, ref1, rtol=5e-2, atol=5e-2)
    assert jnp.allclose(out2, ref2, rtol=5e-2, atol=5e-2)

    print("KERNEL_OK")
</pallas_src>

<mosaic_0001>
module attributes {stable_mosaic.version = 11 : i64} {
  func.func @_dha_kernel(%arg0: memref<24x32xf32, #tpu.memory_space<vmem>>, %arg1: memref<32x128xf32, #tpu.memory_space<vmem>>, %arg2: memref<1x128xf32, #tpu.memory_space<vmem>>, %arg3: memref<24x32xf32, #tpu.memory_space<vmem>>) attributes {dimension_semantics = [], scalar_prefetch = 0 : i64, scratch_operands = 0 : i64, tpu.core_type = #tpu.core_type<tc>} {
    %c0 = arith.constant 0 : index
    %c0_0 = arith.constant 0 : index
    %0 = vector.load %arg0[%c0, %c0_0] : memref<24x32xf32, #tpu.memory_space<vmem>>, vector<24x32xf32>
    %c0_1 = arith.constant 0 : index
    %c0_2 = arith.constant 0 : index
    %1 = vector.load %arg1[%c0_1, %c0_2] : memref<32x128xf32, #tpu.memory_space<vmem>>, vector<32x128xf32>
    %c0_3 = arith.constant 0 : index
    %c0_4 = arith.constant 0 : index
    %2 = vector.load %arg2[%c0_3, %c0_4] : memref<1x128xf32, #tpu.memory_space<vmem>>, vector<1x128xf32>
    %3 = vector.extract_strided_slice %1 {offsets = [0, 0], sizes = [32, 96], strides = [1, 1]} : vector<32x128xf32> to vector<32x96xf32>
    %4 = vector.extract_strided_slice %1 {offsets = [0, 96], sizes = [32, 32], strides = [1, 1]} : vector<32x128xf32> to vector<32x32xf32>
    %5 = vector.extract_strided_slice %2 {offsets = [0, 0], sizes = [1, 96], strides = [1, 1]} : vector<1x128xf32> to vector<1x96xf32>
    %6 = vector.extract_strided_slice %2 {offsets = [0, 96], sizes = [1, 32], strides = [1, 1]} : vector<1x128xf32> to vector<1x32xf32>
    %cst = arith.constant dense<0.000000e+00> : vector<24x96xf32>
    %7 = tpu.matmul %0, %3, %cst {dimension_numbers = #tpu.dot_dimension_numbers<[1], [0], [0], [1], [0, 0, 1, 1], [], []>} : vector<24x32xf32>, vector<32x96xf32>, vector<24x96xf32> -> vector<24x96xf32>
    %8 = vector.broadcast %5 : vector<1x96xf32> to vector<24x96xf32>
    %9 = arith.addf %7, %8 : vector<24x96xf32>
    %10 = vector.extract_strided_slice %9 {offsets = [0, 0], sizes = [16, 32], strides = [1, 1]} : vector<24x96xf32> to vector<16x32xf32>
    %11 = vector.extract_strided_slice %9 {offsets = [0, 32], sizes = [16, 32], strides = [1, 1]} : vector<24x96xf32> to vector<16x32xf32>
    %12 = vector.extract_strided_slice %9 {offsets = [0, 64], sizes = [16, 32], strides = [1, 1]} : vector<24x96xf32> to vector<16x32xf32>
    %13 = vector.extract_strided_slice %9 {offsets = [16, 0], sizes = [8, 32], strides = [1, 1]} : vector<24x96xf32> to vector<8x32xf32>
    %14 = vector.extract_strided_slice %9 {offsets = [16, 32], sizes = [8, 32], strides = [1, 1]} : vector<24x96xf32> to vector<8x32xf32>
    %15 = vector.extract_strided_slice %9 {offsets = [16, 64], sizes = [8, 32], strides = [1, 1]} : vector<24x96xf32> to vector<8x32xf32>
    %cst_5 = arith.constant dense<0.000000e+00> : vector<16x8xf32>
    %16 = tpu.matmul %10, %14, %cst_5 {dimension_numbers = #tpu.dot_dimension_numbers<[1], [1], [0], [0], [0, 0, 1, 0], [], []>} : vector<16x32xf32>, vector<8x32xf32>, vector<16x8xf32> -> vector<16x8xf32>
    %cst_6 = arith.constant dense<0xFF800000> : vector<16xf32>
    %17 = vector.multi_reduction <maximumf>, %16, %cst_6 [1] : vector<16x8xf32> to vector<16xf32>
    %18 = vector.shape_cast %17 : vector<16xf32> to vector<16x1xf32>
    %19 = vector.broadcast %18 : vector<16x1xf32> to vector<16x8xf32>
    %20 = arith.subf %16, %19 : vector<16x8xf32>
    %21 = math.exp %20 : vector<16x8xf32>
    %cst_7 = arith.constant dense<0.000000e+00> : vector<16xf32>
    %22 = vector.multi_reduction <add>, %21, %cst_7 [1] : vector<16x8xf32> to vector<16xf32>
    %23 = vector.shape_cast %22 : vector<16xf32> to vector<16x1xf32>
    %24 = tpu.reciprocal %23 {approx = true} : vector<16x1xf32> -> vector<16x1xf32>
    %25 = vector.broadcast %24 : vector<16x1xf32> to vector<16x8xf32>
    %26 = arith.mulf %21, %25 : vector<16x8xf32>
    %cst_8 = arith.constant dense<0.000000e+00> : vector<16x32xf32>
    %27 = tpu.matmul %26, %15, %cst_8 {dimension_numbers = #tpu.dot_dimension_numbers<[1], [0], [0], [1], [0, 0, 1, 1], [], []>} : vector<16x8xf32>, vector<8x32xf32>, vector<16x32xf32> -> vector<16x32xf32>
    %cst_9 = arith.constant dense<0.000000e+00> : vector<8x16xf32>
    %28 = tpu.matmul %13, %11, %cst_9 {dimension_numbers = #tpu.dot_dimension_numbers<[1], [1], [0], [0], [0, 0, 1, 0], [], []>} : vector<8x32xf32>, vector<16x32xf32>, vector<8x16xf32> -> vector<8x16xf32>
    %cst_10 = arith.constant dense<0xFF800000> : vector<8xf32>
    %29 = vector.multi_reduction <maximumf>, %28, %cst_10 [1] : vector<8x16xf32> to vector<8xf32>
    %30 = vector.shape_cast %29 : vector<8xf32> to vector<8x1xf32>
    %31 = vector.broadcast %30 : vector<8x1xf32> to vector<8x16xf32>
    %32 = arith.subf %28, %31 : vector<8x16xf32>
    %33 = math.exp %32 : vector<8x16xf32>
    %cst_11 = arith.constant dense<0.000000e+00> : vector<8xf32>
    %34 = vector.multi_reduction <add>, %33, %cst_11 [1] : vector<8x16xf32> to vector<8xf32>
    %35 = vector.shape_cast %34 : vector<8xf32> to vector<8x1xf32>
    %36 = tpu.reciprocal %35 {approx = true} : vector<8x1xf32> -> vector<8x1xf32>
    %37 = vector.broadcast %36 : vector<8x1xf32> to vector<8x16xf32>
    %38 = arith.mulf %33, %37 : vector<8x16xf32>
    %cst_12 = arith.constant dense<0.000000e+00> : vector<8x32xf32>
    %39 = tpu.matmul %38, %12, %cst_12 {dimension_numbers = #tpu.dot_dimension_numbers<[1], [0], [0], [1], [0, 0, 1, 1], [], []>} : vector<8x16xf32>, vector<16x32xf32>, vector<8x32xf32> -> vector<8x32xf32>
    %40 = tpu.concatenate %27, %39 in 0 : vector<16x32xf32>, vector<8x32xf32> -> vector<24x32xf32>
    %cst_13 = arith.constant dense<0.000000e+00> : vector<24x32xf32>
    %41 = tpu.matmul %40, %4, %cst_13 {dimension_numbers = #tpu.dot_dimension_numbers<[1], [0], [0], [1], [0, 0, 1, 1], [], []>} : vector<24x32xf32>, vector<32x32xf32>, vector<24x32xf32> -> vector<24x32xf32>
    %42 = vector.broadcast %6 : vector<1x32xf32> to vector<24x32xf32>
    %43 = arith.addf %41, %42 : vector<24x32xf32>
    %c0_14 = arith.constant 0 : index
    %c0_15 = arith.constant 0 : index
    %44 = vector.load %arg3[%c0_14, %c0_15] : memref<24x32xf32, #tpu.memory_space<vmem>>, vector<24x32xf32>
    tpu.vector_store %arg3[%c0_14, %c0_15], %43 {strides = array<i32>} : memref<24x32xf32, #tpu.memory_space<vmem>>, vector<24x32xf32>,
    return
  }
}

</mosaic_0001>

<llo_original>
// kernel: double_headed_attention.1
$region0: #{double_headed_attention.1}
  #allocation0 [shape = 'u32[]', space=smem, size = 0x4, offset = 0x4, fixed_abs, tag = 'smem constant byte address 0x4 - core index']
  #allocation1 [shape = 'u32[72,128]{1,0:T(1,128)}', space=vmem, size = 0x9000, scoped, tag = 'internal scratch']
  %s0 = inlined_call_operand.vmem [shape: f32[24,32], index: 0, kind: input, shape index: {}]
  %s1 = inlined_call_operand.vmem [shape: f32[32,128], index: 1, kind: input, shape index: {}]
  %s2 = inlined_call_operand.vmem [shape: f32[1,128], index: 2, kind: input, shape index: {}]
  %s3 = inlined_call_operand.vmem [shape: f32[24,32], index: 3, kind: output, shape index: {}]
  %s4 = sld [smem:[#allocation0]]
  $region22: #{double_headed_attention.1} parent=0
    _
  %s6 = ssub.s32 1, %s4
  %s7 = scalar_select 0, %s6, %s4
  // Predicated region
  $region2: #{double_headed_attention.1} parent=0 // pred_check
    _
  $region3: #{double_headed_attention.1} parent=0 // pred_check_branch
    %9 = sbr.rel (0) target = $region5
  $region4: #{double_headed_attention.1} parent=0 // pred_region
    _
  $region5: #{double_headed_attention.1} parent=0 // pred_fallthru
    _
  // Predicated region
  $region6: #{double_headed_attention.1} parent=0 // pred_check
    _
  $region7: #{double_headed_attention.1} parent=0 // pred_check_branch
    %11 = sbr.rel (0) target = $region9
  $region8: #{double_headed_attention.1} parent=0 // pred_region
    _
  $region9: #{double_headed_attention.1} parent=0 // pred_fallthru
    _
  // Predicated region
  $region10: #{double_headed_attention.1} parent=0 // pred_check
    _
  $region11: #{double_headed_attention.1} parent=0 // pred_check_branch
    %13 = sbr.rel (0) target = $region13
  $region12: #{double_headed_attention.1} parent=0 // pred_region
    _
  $region13: #{double_headed_attention.1} parent=0 // pred_fallthru
    _
  %v14 = vld [vmem:[%s0] sm:$0xff]
  %v15 = vld [vmem:[%s0 + $0x8] sm:$0xff]
  %v16 = vld [vmem:[%s0 + $0x10] sm:$0xff]
  %v17 = vld [vmem:[%s1] sm:$0xff]
  %v18 = vld [vmem:[%s1 + $0x8] sm:$0xff]
  %v19 = vld [vmem:[%s1 + $0x10] sm:$0xff]
  %v20 = vld [vmem:[%s1 + $0x18] sm:$0xff]
  %v21 = vld [vmem:[%s2] sm:$0x1]
  %v23 = vperm.slane %v21, 0
  %vm25 = vcmask 261120
  %v27 = vsel %vm25, %v14, 0
  %v30 = vsel %vm25, %v15, 0
  %v33 = vsel %vm25, %v16, 0
  %35 = vmatpush.msra.mxu0 0.0
  %36 = vmatpush.msra.mxu0 0.0
  %37 = vmatpush.msra.mxu0 0.0
  %38 = vmatpush.msra.mxu0 0.0
  %39 = vmatpush.msra.mxu0 0.0
  %40 = vmatpush.msra.mxu0 0.0
  %41 = vmatpush.msra.mxu0 0.0
  %42 = vmatpush.msra.mxu0 0.0
  %43 = vmatpush.msra.mxu0 0.0
  %44 = vmatpush.msra.mxu0 0.0
  %45 = vmatpush.msra.mxu0 0.0
  %46 = vmatpush.msra.mxu0 0.0
  %47 = vmatpush.msra.mxu0 %v20
  %48 = vmatpush.msra.mxu0 %v19
  %49 = vmatpush.msra.mxu0 %v18
  %50 = vmatpush.msra.mxu0 %v17
  %51 = vmatmul.f32.gmra.mxu0 %v27
  %v52 = vpop.f32.mrf.mxu0
  %v53 = vadd.f32 %v23, %v52
  %54 = vmatmul.f32.gmra.mxu0 %v30
  %v55 = vpop.f32.mrf.mxu0
  %v56 = vadd.f32 %v23, %v55
  %57 = vmatmul.f32.gmra.mxu0 %v33
  %v58 = vpop.f32.mrf.mxu0
  %v59 = vadd.f32 %v23, %v58
  %60 = vdwg.mxu0
  %62 = vrot.lane.b32.xlu0 %v59, 96
  %v63 = vpop.permute.xlu0 %62
  %v65 = vsel %vm25, %v53, 0
  %v68 = vsel %vm25, %v56, 0
  %v70 = vsel %vm25, %v63, 0
  %72 = vmatpush.xpose.msra.mxu0 0.0
  %73 = vmatpush.xpose.msra.mxu0 0.0
  %74 = vmatpush.xpose.msra.mxu0 0.0
  %75 = vmatpush.xpose.msra.mxu0 0.0
  %76 = vmatpush.xpose.msra.mxu0 0.0
  %77 = vmatpush.xpose.msra.mxu0 0.0
  %78 = vmatpush.xpose.msra.mxu0 0.0
  %79 = vmatpush.xpose.msra.mxu0 0.0
  %80 = vmatpush.xpose.msra.mxu0 0.0
  %81 = vmatpush.xpose.msra.mxu0 0.0
  %82 = vmatpush.xpose.msra.mxu0 0.0
  %83 = vmatpush.xpose.msra.mxu0 0.0
  %84 = vmatpush.xpose.msra.mxu0 0.0
  %85 = vmatpush.xpose.msra.mxu0 0.0
  %86 = vmatpush.xpose.msra.mxu0 0.0
  %87 = vmatpush.xpose.msra.mxu0 %v70
  %88 = vmatmul.f32.gmra.mxu0 %v65
  %v89 = vpop.f32.mrf.mxu0
  %v90 = vadd.f32 0.0, %v89
  %91 = vmatmul.f32.gmra.mxu0 %v68
  %v92 = vpop.f32.mrf.mxu0
  %v93 = vadd.f32 0.0, %v92
  %94 = vdwg.mxu0
  %vm95 = vcmask 64512
  %v96 = vsel %vm95, %v90, -inf
  %97 = vmax.xlane.f32.xlu0 %v96
  %v98 = vpop.xlane.xlu0 %97
  %v99 = vsel %vm95, %v93, -inf
  %100 = vmax.xlane.f32.xlu0 %v99
  %v101 = vpop.xlane.xlu0 %100
  %v102 = vsub.f32 %v90, %v98
  %v103 = vsub.f32 %v93, %v101
  %v104 = vmul.f32 %v102, 1.442695
  %v105 = vpow.pop %v104
  %v106 = vmul.f32 %v103, 1.442695
  %v107 = vpow.pop %v106
  %v108 = vsel %vm95, %v105, 0.0
  %109 = vadd.xlane.f32.xlu0 %v108
  %v110 = vpop.xlane.xlu0 %109
  %v111 = vsel %vm95, %v107, 0.0
  %112 = vadd.xlane.f32.xlu0 %v111
  %v113 = vpop.xlane.xlu0 %112
  %v114 = vrcp.pop %v110
  %v115 = vrcp.pop %v113
  %v116 = vmul.f32 %v105, %v114
  %v117 = vmul.f32 %v107, %v115
  %118 = vrot.lane.b32.xlu0 %v59, 64
  %v119 = vpop.permute.xlu0 %118
  %v122 = vsel %vm95, %v116, 0
  %v125 = vsel %vm95, %v117, 0
  %127 = vmatpush.msra.mxu0 0.0
  %128 = vmatpush.msra.mxu0 0.0
  %129 = vmatpush.msra.mxu0 0.0
  %130 = vmatpush.msra.mxu0 0.0
  %131 = vmatpush.msra.mxu0 0.0
  %132 = vmatpush.msra.mxu0 0.0
  %133 = vmatpush.msra.mxu0 0.0
  %134 = vmatpush.msra.mxu0 0.0
  %135 = vmatpush.msra.mxu0 0.0
  %136 = vmatpush.msra.mxu0 0.0
  %137 = vmatpush.msra.mxu0 0.0
  %138 = vmatpush.msra.mxu0 0.0
  %139 = vmatpush.msra.mxu0 0.0
  %140 = vmatpush.msra.mxu0 0.0
  %141 = vmatpush.msra.mxu0 0.0
  %142 = vmatpush.msra.mxu0 %v119
  %143 = vmatmul.f32.gmra.mxu0 %v122
  %v144 = vpop.f32.mrf.mxu0
  %v145 = vadd.f32 0.0, %v144
  %146 = vmatmul.f32.gmra.mxu0 %v125
  %v147 = vpop.f32.mrf.mxu0
  %v148 = vadd.f32 0.0, %v147
  %149 = vdwg.mxu0
  %150 = vrot.lane.b32.xlu0 %v53, 96
  %v151 = vpop.permute.xlu0 %150
  %152 = vrot.lane.b32.xlu0 %v56, 96
  %v153 = vpop.permute.xlu0 %152
  %v154 = vsel %vm25, %v59, 0
  %v156 = vsel %vm25, %v151, 0
  %v158 = vsel %vm25, %v153, 0
  %160 = vmatpush.xpose.msra.mxu0 0.0
  %161 = vmatpush.xpose.msra.mxu0 0.0
  %162 = vmatpush.xpose.msra.mxu0 0.0
  %163 = vmatpush.xpose.msra.mxu0 0.0
  %164 = vmatpush.xpose.msra.mxu0 0.0
  %165 = vmatpush.xpose.msra.mxu0 0.0
  %166 = vmatpush.xpose.msra.mxu0 0.0
  %167 = vmatpush.xpose.msra.mxu0 0.0
  %168 = vmatpush.xpose.msra.mxu0 0.0
  %169 = vmatpush.xpose.msra.mxu0 0.0
  %170 = vmatpush.xpose.msra.mxu0 0.0
  %171 = vmatpush.xpose.msra.mxu0 0.0
  %172 = vmatpush.xpose.msra.mxu0 0.0
  %173 = vmatpush.xpose.msra.mxu0 0.0
  %174 = vmatpush.xpose.msra.mxu0 %v158
  %175 = vmatpush.xpose.msra.mxu0 %v156
  %176 = vmatmul.f32.gmra.mxu0 %v154
  %v177 = vpop.f32.mrf.mxu0
  %v178 = vadd.f32 0.0, %v177
  %179 = vdwg.mxu0
  %vm180 = vcmask 130048
  %v181 = vsel %vm180, %v178, -inf
  %182 = vmax.xlane.f32.xlu0 %v181
  %v183 = vpop.xlane.xlu0 %182
  %v184 = vsub.f32 %v178, %v183
  %v185 = vmul.f32 %v184, 1.442695
  %v186 = vpow.pop %v185
  %v187 = vsel %vm180, %v186, 0.0
  %188 = vadd.xlane.f32.xlu0 %v187
  %v189 = vpop.xlane.xlu0 %188
  %v190 = vrcp.pop %v189
  %v191 = vmul.f32 %v186, %v190
  %192 = vrot.lane.b32.xlu0 %v53, 64
  %v193 = vpop.permute.xlu0 %192
  %194 = vrot.lane.b32.xlu0 %v56, 64
  %v195 = vpop.permute.xlu0 %194
  %v199 = vsel %vm180, %v191, 0
  %201 = vmatpush.msra.mxu0 0.0
  %202 = vmatpush.msra.mxu0 0.0
  %203 = vmatpush.msra.mxu0 0.0
  %204 = vmatpush.msra.mxu0 0.0
  %205 = vmatpush.msra.mxu0 0.0
  %206 = vmatpush.msra.mxu0 0.0
  %207 = vmatpush.msra.mxu0 0.0
  %208 = vmatpush.msra.mxu0 0.0
  %209 = vmatpush.msra.mxu0 0.0
  %210 = vmatpush.msra.mxu0 0.0
  %211 = vmatpush.msra.mxu0 0.0
  %212 = vmatpush.msra.mxu0 0.0
  %213 = vmatpush.msra.mxu0 0.0
  %214 = vmatpush.msra.mxu0 0.0
  %215 = vmatpush.msra.mxu0 %v195
  %216 = vmatpush.msra.mxu0 %v193
  %217 = vmatmul.f32.gmra.mxu0 %v199
  %v218 = vpop.f32.mrf.mxu0
  %v219 = vadd.f32 0.0, %v218
  %220 = vdwg.mxu0
  %225 = vrot.lane.b32.xlu0 %v17, 32
  %v226 = vpop.permute.xlu0 %225
  %227 = vrot.lane.b32.xlu0 %v18, 32
  %v228 = vpop.permute.xlu0 %227
  %229 = vrot.lane.b32.xlu0 %v19, 32
  %v230 = vpop.permute.xlu0 %229
  %231 = vrot.lane.b32.xlu0 %v20, 32
  %v232 = vpop.permute.xlu0 %231
  %237 = vrot.lane.b32.xlu0 %v23, 32
  %v238 = vpop.permute.xlu0 %237
  %v241 = vsel %vm25, %v145, 0
  %v244 = vsel %vm25, %v148, 0
  %v247 = vsel %vm25, %v219, 0
  %249 = vmatpush.msra.mxu0 0.0
  %250 = vmatpush.msra.mxu0 0.0
  %251 = vmatpush.msra.mxu0 0.0
  %252 = vmatpush.msra.mxu0 0.0
  %253 = vmatpush.msra.mxu0 0.0
  %254 = vmatpush.msra.mxu0 0.0
  %255 = vmatpush.msra.mxu0 0.0
  %256 = vmatpush.msra.mxu0 0.0
  %257 = vmatpush.msra.mxu0 0.0
  %258 = vmatpush.msra.mxu0 0.0
  %259 = vmatpush.msra.mxu0 0.0
  %260 = vmatpush.msra.mxu0 0.0
  %261 = vmatpush.msra.mxu0 %v232
  %262 = vmatpush.msra.mxu0 %v230
  %263 = vmatpush.msra.mxu0 %v228
  %264 = vmatpush.msra.mxu0 %v226
  %265 = vmatmul.f32.gmra.mxu0 %v241
  %v266 = vpop.f32.mrf.mxu0
  %v267 = vadd.f32 %v238, %v266
  %268 = vmatmul.f32.gmra.mxu0 %v244
  %v269 = vpop.f32.mrf.mxu0
  %v270 = vadd.f32 %v238, %v269
  %271 = vmatmul.f32.gmra.mxu0 %v247
  %v272 = vpop.f32.mrf.mxu0
  %v273 = vadd.f32 %v238, %v272
  %274 = vdwg.mxu0
  %275 = vst.msk [vmem:[%s3] sm:$0xff] %vm25, %v267
  %276 = vst.msk [vmem:[%s3 + $0x8] sm:$0xff] %vm25, %v270
  %277 = vst.msk [vmem:[%s3 + $0x10] sm:$0xff] %vm25, %v273
  // Predicated region
  $region14: #{double_headed_attention.1} parent=0 // pred_check
    _
  $region15: #{double_headed_attention.1} parent=0 // pred_check_branch
    %279 = sbr.rel (0) target = $region17
  $region16: #{double_headed_attention.1} parent=0 // pred_region
    _
  $region17: #{double_headed_attention.1} parent=0 // pred_fallthru
    _
  // Predicated region
  $region18: #{double_headed_attention.1} parent=0 // pred_check
    _
  $region19: #{double_headed_attention.1} parent=0 // pred_check_branch
    %281 = sbr.rel (0) target = $region21
  $region20: #{double_headed_attention.1} parent=0 // pred_region
    _
  $region21: #{double_headed_attention.1} parent=0 // pred_fallthru
    _

</llo_original>
